<compile_context>
chip_gen: v7x
topology: tpu7x:2x2x1
jax: 0.10.0
libtpu: 0.0.40
codegen_flags: <defaults>
</compile_context>

<pallas_src>
import functools

import jax
import jax.numpy as jnp
from jax.experimental import pallas as pl
from jax.experimental.pallas import tpu as pltpu

LANE = 128                               # TPU lane width (last-dim padding target)
ROW_TILE = 256                           # row tile (parallel axis) for the tiled path
_K_TILE_CANDIDATES = (2048, 1024, 512, 256)  # contraction tile: largest dividing n_p


def _round_up(x, m):
    return ((x + m - 1) // m) * m


def _pad2d(a, rows, cols):
    pr, pc = rows - a.shape[0], cols - a.shape[1]
    if pr or pc:
        a = jnp.pad(a, ((0, pr), (0, pc)))
    return a


def _vmem_capacity_bytes():
    try:
        return int(pltpu.get_tpu_info().vmem_capacity_bytes)
    except Exception:
        return 64 << 20  # conservative fallback: v7x per-TensorCore VMEM


_VMEM_BYTES = _vmem_capacity_bytes()
# Fused (single pallas_call, everything VMEM-resident) path cap, per generation:
# v5e/v6e (128 MiB VMEM) -> 4096 nodes; v7x (64 MiB) -> 2048 nodes.
FUSE_MAX_NODES = 4096 if _VMEM_BYTES >= (96 << 20) else 2048
_VMEM_LIMIT_BYTES = int(max(min(_VMEM_BYTES - (16 << 20), 100 << 20), 32 << 20))


# ----------------------------------------------------------------------------
# Shared preprocessing (done ONCE per forward, not per layer).
# ----------------------------------------------------------------------------
def _prepare_graph(adj, n_p, adj_dtype):
    """Binary adjacency (padded, adj_dtype) + f32 reciprocal in-degree column."""
    n = adj.shape[0]
    binary = adj > 0
    deg = binary.sum(axis=1).astype(jnp.float32)
    dinv = jnp.where(deg > 0, 1.0 / jnp.maximum(deg, 1.0), 0.0)
    adj_p = _pad2d(binary.astype(adj_dtype), n_p, n_p)
    dinv_p = jnp.pad(dinv, (0, n_p - n)).reshape(n_p, 1)
    return adj_p, dinv_p


def _prep_layer_weights(w_self, w_neigh, bias, f_in_p, f_out_p):
    ws = _pad2d(w_self, f_in_p, f_out_p).astype(jnp.bfloat16)
    wn = _pad2d(w_neigh, f_in_p, f_out_p).astype(jnp.bfloat16)
    b = _pad2d(bias, 1, f_out_p).astype(jnp.float32)
    return ws, wn, b


# ----------------------------------------------------------------------------
# Fused two-layer kernel (small graphs: everything resident in VMEM).
# ----------------------------------------------------------------------------
def _fused_two_layer_kernel(adj_ref, dinv_ref, x_ref,
                            ws1_ref, wn1_ref, b1_ref,
                            ws2_ref, wn2_ref, b2_ref, o_ref):
    adj = adj_ref[...]                       # (n_p, n_p) bf16, binary {0,1}
    dinv = dinv_ref[...]                     # (n_p, 1)  f32 reciprocal in-degree
    x = x_ref[...]                           # (n_p, f0) bf16

    # ---- layer 1: mean aggregation, two projections, bias, relu ----
    agg1 = jnp.dot(adj, x, preferred_element_type=jnp.float32) * dinv
    h = (jnp.dot(x, ws1_ref[...], preferred_element_type=jnp.float32)
         + jnp.dot(agg1.astype(jnp.bfloat16), wn1_ref[...],
                   preferred_element_type=jnp.float32)
         + b1_ref[...])
    h = jnp.maximum(h, 0.0).astype(jnp.bfloat16)

    # ---- layer 2: same, no relu ----
    agg2 = jnp.dot(adj, h, preferred_element_type=jnp.float32) * dinv
    out = (jnp.dot(h, ws2_ref[...], preferred_element_type=jnp.float32)
           + jnp.dot(agg2.astype(jnp.bfloat16), wn2_ref[...],
                     preferred_element_type=jnp.float32)
           + b2_ref[...])
    o_ref[...] = out.astype(o_ref.dtype)


def graphsage_forward_fused(adj, features, params):
    n, f_in = features.shape
    h_feats = params["w_neigh1"].shape[1]
    num_classes = params["w_neigh2"].shape[1]

    f0 = _round_up(f_in, LANE)
    f1 = _round_up(h_feats, LANE)
    f2 = _round_up(num_classes, LANE)
    n_p = _round_up(n, LANE)                 # lane-dense adjacency / outputs

    adj_p, dinv_p = _prepare_graph(adj, n_p, jnp.bfloat16)
    x_p = _pad2d(features, n_p, f0).astype(jnp.bfloat16)
    ws1, wn1, b1 = _prep_layer_weights(params["w_self1"], params["w_neigh1"],
                                       params["b1"], f0, f1)
    ws2, wn2, b2 = _prep_layer_weights(params["w_self2"], params["w_neigh2"],
                                       params["b2"], f1, f2)

    full = lambda a: pl.BlockSpec(a.shape, lambda: (0,) * a.ndim)
    out = pl.pallas_call(
        _fused_two_layer_kernel,
        out_shape=jax.ShapeDtypeStruct((n_p, f2), jnp.float32),
        grid=(),
        in_specs=[full(adj_p), full(dinv_p), full(x_p),
                  full(ws1), full(wn1), full(b1),
                  full(ws2), full(wn2), full(b2)],
        out_specs=pl.BlockSpec((n_p, f2), lambda: (0, 0)),
        compiler_params=pltpu.CompilerParams(vmem_limit_bytes=_VMEM_LIMIT_BYTES),
    )(adj_p, dinv_p, x_p, ws1, wn1, b1, ws2, wn2, b2)
    return out[:n, :num_classes]


# ----------------------------------------------------------------------------
# Tiled single-layer kernel (large graphs).
# Grid: (row tiles -> "parallel", contraction tiles -> "arbitrary").
# ----------------------------------------------------------------------------
def _sage_tiled_kernel(adj_ref, dinv_ref, x_ref, ws_ref, wn_ref, b_ref,
                       o_ref, acc_ref, self_ref, *, apply_relu, t_i, t_k):
    i = pl.program_id(0)
    k = pl.program_id(1)

    @pl.when(k == 0)
    def _():
        acc_ref[...] = jnp.zeros_like(acc_ref)
        # Self-projection for this row tile at k==0: spreads MXU work across the
        # pipeline instead of piling it into the last-k finalize.
        row = pl.multiple_of(i * t_i, t_i)
        xi = x_ref[pl.ds(row, t_i), :]
        self_ref[...] = jnp.dot(xi, ws_ref[...], preferred_element_type=jnp.float32)

    # Neighbor-sum accumulation over contraction tiles. Adjacency is binary int8
    # in HBM (half the bytes of bf16); cast to bf16 in VMEM for the MXU.
    col = pl.multiple_of(k * t_k, t_k)
    xk = x_ref[pl.ds(col, t_k), :]
    adj = adj_ref[...].astype(jnp.float32).astype(jnp.bfloat16)
    acc_ref[...] += jnp.dot(adj, xk, preferred_element_type=jnp.float32)

    @pl.when(k == pl.num_programs(1) - 1)
    def _():
        agg = acc_ref[...] * dinv_ref[...]          # f32 mean (1/deg applied in f32)
        out = (self_ref[...]
               + jnp.dot(agg.astype(jnp.bfloat16), wn_ref[...],
                         preferred_element_type=jnp.float32)
               + b_ref[...])
        if apply_relu:
            out = jnp.maximum(out, 0.0)
        o_ref[...] = out.astype(o_ref.dtype)


def _sage_layer_tiled(adj_p, dinv_p, x_p, ws, wn, b, *,
                      apply_relu, out_dtype, t_i, t_k):
    n_p = adj_p.shape[0]
    f_in_p = x_p.shape[1]
    f_out_p = ws.shape[1]
    ni = n_p // t_i
    nk = n_p // t_k
    kernel = functools.partial(_sage_tiled_kernel,
                               apply_relu=apply_relu, t_i=t_i, t_k=t_k)
    return pl.pallas_call(
        kernel,
        out_shape=jax.ShapeDtypeStruct((n_p, f_out_p), out_dtype),
        grid=(ni, nk),
        in_specs=[
            pl.BlockSpec((t_i, t_k), lambda i, k: (i, k)),         # int8 adjacency tile
            pl.BlockSpec((t_i, 1), lambda i, k: (i, 0)),           # f32 1/deg (row tile)
            pl.BlockSpec((n_p, f_in_p), lambda i, k: (0, 0)),      # x: VMEM-resident
            pl.BlockSpec((f_in_p, f_out_p), lambda i, k: (0, 0)),  # W_self
            pl.BlockSpec((f_in_p, f_out_p), lambda i, k: (0, 0)),  # W_neigh
            pl.BlockSpec((1, f_out_p), lambda i, k: (0, 0)),       # bias
        ],
        out_specs=pl.BlockSpec((t_i, f_out_p), lambda i, k: (i, 0)),
        scratch_shapes=[pltpu.VMEM((t_i, f_in_p), jnp.float32),    # neighbor-sum acc
                        pltpu.VMEM((t_i, f_out_p), jnp.float32)],  # self-projection
        compiler_params=pltpu.CompilerParams(
            dimension_semantics=("parallel", "arbitrary"),
            vmem_limit_bytes=_VMEM_LIMIT_BYTES),
    )(adj_p, dinv_p, x_p, ws, wn, b)


def graphsage_forward_tiled(adj, features, params):
    n, f_in = features.shape
    h_feats = params["w_neigh1"].shape[1]
    num_classes = params["w_neigh2"].shape[1]

    f0 = _round_up(f_in, LANE)
    f1 = _round_up(h_feats, LANE)
    f2 = _round_up(num_classes, LANE)

    t_i = ROW_TILE
    n_p = _round_up(n, t_i)
    t_k = next(c for c in _K_TILE_CANDIDATES if n_p % c == 0)

    # Graph prep (binarize + pad + int8 cast + 1/deg) happens ONCE per forward.
    adj_p, dinv_p = _prepare_graph(adj, n_p, jnp.int8)
    x_p = _pad2d(features, n_p, f0).astype(jnp.bfloat16)
    ws1, wn1, b1 = _prep_layer_weights(params["w_self1"], params["w_neigh1"],
                                       params["b1"], f0, f1)
    ws2, wn2, b2 = _prep_layer_weights(params["w_self2"], params["w_neigh2"],
                                       params["b2"], f1, f2)

    # Hidden activation stays padded bf16 and is fed straight into layer 2.
    h = _sage_layer_tiled(adj_p, dinv_p, x_p, ws1, wn1, b1,
                          apply_relu=True, out_dtype=jnp.bfloat16, t_i=t_i, t_k=t_k)
    out = _sage_layer_tiled(adj_p, dinv_p, h, ws2, wn2, b2,
                            apply_relu=False, out_dtype=jnp.float32, t_i=t_i, t_k=t_k)
    return out[:n, :num_classes]


def graphsage_forward(adj, features, params):
    if features.shape[0] <= FUSE_MAX_NODES:
        return graphsage_forward_fused(adj, features, params)
    return graphsage_forward_tiled(adj, features, params)


# ----------------------------------------------------------------------------
# Params / demo / references
# ----------------------------------------------------------------------------
def init_params(key, in_feats, h_feats, num_classes):
    ks = jax.random.split(key, 6)
    s1 = 1.0 / jnp.sqrt(in_feats)
    s2 = 1.0 / jnp.sqrt(h_feats)
    return {
        "w_neigh1": s1 * jax.random.normal(ks[0], (in_feats, h_feats), jnp.float32),
        "w_self1": s1 * jax.random.normal(ks[1], (in_feats, h_feats), jnp.float32),
        "b1": 0.1 * jax.random.normal(ks[2], (1, h_feats), jnp.float32),
        "w_neigh2": s2 * jax.random.normal(ks[3], (h_feats, num_classes), jnp.float32),
        "w_self2": s2 * jax.random.normal(ks[4], (h_feats, num_classes), jnp.float32),
        "b2": 0.1 * jax.random.normal(ks[5], (1, num_classes), jnp.float32),
    }


def make_graph(key, n, in_feats):
    k_adj, k_feat = jax.random.split(key)
    # Random directed graph as dense BINARY adjacency; A[v, u] = 1 iff edge u -> v.
    adj = jax.random.bernoulli(k_adj, p=0.25, shape=(n, n)).astype(jnp.float32)
    features = jax.random.normal(k_feat, (n, in_feats), jnp.float32)
    return adj, features


def ref_forward_f32(adj, x, params):
    a = (adj > 0).astype(jnp.float32)
    deg = jnp.clip(a.sum(axis=1, keepdims=True), 1.0, None)
    an = a / deg

    def layer(xx, wn, ws, b, relu):
        r = xx @ ws + (an @ xx) @ wn + b
        return jnp.maximum(r, 0.0) if relu else r

    h = layer(x, params["w_neigh1"], params["w_self1"], params["b1"], True)
    return layer(h, params["w_neigh2"], params["w_self2"], params["b2"], False)


def ref_forward_mixed(adj, x, params):
    """Mirrors the kernel's math: binary bf16 adjacency, bf16 operands,
    f32 MXU accumulation, f32 1/deg scale."""
    a = adj > 0
    deg = a.sum(axis=1, keepdims=True).astype(jnp.float32)
    dinv = jnp.where(deg > 0, 1.0 / jnp.maximum(deg, 1.0), 0.0)
    ab = a.astype(jnp.bfloat16)

    def layer(xx, wn, ws, b, relu):
        xb = xx.astype(jnp.bfloat16)
        agg = jnp.dot(ab, xb, preferred_element_type=jnp.float32) * dinv
        out = (jnp.dot(xb, ws.astype(jnp.bfloat16), preferred_element_type=jnp.float32)
               + jnp.dot(agg.astype(jnp.bfloat16), wn.astype(jnp.bfloat16),
                         preferred_element_type=jnp.float32)
               + b)
        return jnp.maximum(out, 0.0) if relu else out

    h = layer(x, params["w_neigh1"], params["w_self1"], params["b1"], True)
    return layer(h, params["w_neigh2"], params["w_self2"], params["b2"], False)


if __name__ == "__main__":
    key = jax.random.PRNGKey(0)
    k_g1, k_p1, k_g2, k_p2 = jax.random.split(key, 4)

    # --- small graph: exercises the fused two-layer kernel and the tiled path ---
    N, IN_FEATS, H_FEATS, NUM_CLASSES = 32, 16, 32, 8
    adj, features = make_graph(k_g1, N, IN_FEATS)
    params = init_params(k_p1, IN_FEATS, H_FEATS, NUM_CLASSES)

    out_fused = jax.block_until_ready(graphsage_forward(adj, features, params))
    out_tiled = jax.block_until_ready(graphsage_forward_tiled(adj, features, params))
    assert out_fused.shape == (N, NUM_CLASSES)
    assert out_tiled.shape == (N, NUM_CLASSES)
    assert jnp.isfinite(out_fused).all()
    assert jnp.isfinite(out_tiled).all()

    ref_m = ref_forward_mixed(adj, features, params)
    ref_f = ref_forward_f32(adj, features, params)
    assert jnp.allclose(out_fused, ref_m, atol=2e-2, rtol=2e-2)
    assert jnp.allclose(out_tiled, ref_m, atol=2e-2, rtol=2e-2)
    assert jnp.allclose(out_fused, out_tiled, atol=2e-2, rtol=2e-2)
    assert jnp.allclose(out_fused, ref_f, atol=1e-1, rtol=1e-1)

    # --- larger graph: exercises the multi-tile (parallel x arbitrary) grid ---
    N2, IN2, H2, C2 = 600, 48, 64, 10
    adj2, feat2 = make_graph(k_g2, N2, IN2)
    params2 = init_params(k_p2, IN2, H2, C2)

    out2_tiled = jax.block_until_ready(graphsage_forward_tiled(adj2, feat2, params2))
    out2_fused = jax.block_until_ready(graphsage_forward(adj2, feat2, params2))
    assert out2_tiled.shape == (N2, C2)
    assert jnp.isfinite(out2_tiled).all()
    ref2 = ref_forward_mixed(adj2, feat2, params2)
    assert jnp.allclose(out2_tiled, ref2, atol=2e-2, rtol=2e-2)
    assert jnp.allclose(out2_fused, out2_tiled, atol=2e-2, rtol=2e-2)

    print("KERNEL_OK")
</pallas_src>

<mosaic_0001>
module attributes {stable_mosaic.version = 11 : i64} {
  func.func @_fused_two_layer_kernel(%arg0: memref<128x128xbf16, #tpu.memory_space<vmem>>, %arg1: memref<128x1xf32, #tpu.memory_space<vmem>>, %arg2: memref<128x128xbf16, #tpu.memory_space<vmem>>, %arg3: memref<128x128xbf16, #tpu.memory_space<vmem>>, %arg4: memref<128x128xbf16, #tpu.memory_space<vmem>>, %arg5: memref<1x128xf32, #tpu.memory_space<vmem>>, %arg6: memref<128x128xbf16, #tpu.memory_space<vmem>>, %arg7: memref<128x128xbf16, #tpu.memory_space<vmem>>, %arg8: memref<1x128xf32, #tpu.memory_space<vmem>>, %arg9: memref<128x128xf32, #tpu.memory_space<vmem>>) attributes {dimension_semantics = [], scalar_prefetch = 0 : i64, scratch_operands = 0 : i64, tpu.core_type = #tpu.core_type<tc>} {
    %c0 = arith.constant 0 : index
    %c0_0 = arith.constant 0 : index
    %0 = vector.load %arg0[%c0, %c0_0] : memref<128x128xbf16, #tpu.memory_space<vmem>>, vector<128x128xbf16>
    %c0_1 = arith.constant 0 : index
    %c0_2 = arith.constant 0 : index
    %1 = vector.load %arg1[%c0_1, %c0_2] : memref<128x1xf32, #tpu.memory_space<vmem>>, vector<128x1xf32>
    %c0_3 = arith.constant 0 : index
    %c0_4 = arith.constant 0 : index
    %2 = vector.load %arg2[%c0_3, %c0_4] : memref<128x128xbf16, #tpu.memory_space<vmem>>, vector<128x128xbf16>
    %cst = arith.constant dense<0.000000e+00> : vector<128x128xf32>
    %3 = tpu.matmul %0, %2, %cst {dimension_numbers = #tpu.dot_dimension_numbers<[1], [0], [0], [1], [0, 0, 1, 1], [], []>} : vector<128x128xbf16>, vector<128x128xbf16>, vector<128x128xf32> -> vector<128x128xf32>
    %4 = vector.broadcast %1 : vector<128x1xf32> to vector<128x128xf32>
    %5 = arith.mulf %3, %4 : vector<128x128xf32>
    %c0_5 = arith.constant 0 : index
    %c0_6 = arith.constant 0 : index
    %6 = vector.load %arg3[%c0_5, %c0_6] : memref<128x128xbf16, #tpu.memory_space<vmem>>, vector<128x128xbf16>
    %cst_7 = arith.constant dense<0.000000e+00> : vector<128x128xf32>
    %7 = tpu.matmul %2, %6, %cst_7 {dimension_numbers = #tpu.dot_dimension_numbers<[1], [0], [0], [1], [0, 0, 1, 1], [], []>} : vector<128x128xbf16>, vector<128x128xbf16>, vector<128x128xf32> -> vector<128x128xf32>
    %8 = arith.truncf %5 : vector<128x128xf32> to vector<128x128xbf16>
    %c0_8 = arith.constant 0 : index
    %c0_9 = arith.constant 0 : index
    %9 = vector.load %arg4[%c0_8, %c0_9] : memref<128x128xbf16, #tpu.memory_space<vmem>>, vector<128x128xbf16>
    %cst_10 = arith.constant dense<0.000000e+00> : vector<128x128xf32>
    %10 = tpu.matmul %8, %9, %cst_10 {dimension_numbers = #tpu.dot_dimension_numbers<[1], [0], [0], [1], [0, 0, 1, 1], [], []>} : vector<128x128xbf16>, vector<128x128xbf16>, vector<128x128xf32> -> vector<128x128xf32>
    %11 = arith.addf %7, %10 : vector<128x128xf32>
    %c0_11 = arith.constant 0 : index
    %c0_12 = arith.constant 0 : index
    %12 = vector.load %arg5[%c0_11, %c0_12] : memref<1x128xf32, #tpu.memory_space<vmem>>, vector<1x128xf32>
    %13 = vector.broadcast %12 : vector<1x128xf32> to vector<128x128xf32>
    %14 = arith.addf %11, %13 : vector<128x128xf32>
    %cst_13 = arith.constant 0.000000e+00 : f32
    %15 = vector.broadcast %cst_13 : f32 to vector<128x128xf32>
    %16 = arith.maximumf %14, %15 : vector<128x128xf32>
    %17 = arith.truncf %16 : vector<128x128xf32> to vector<128x128xbf16>
    %cst_14 = arith.constant dense<0.000000e+00> : vector<128x128xf32>
    %18 = tpu.matmul %0, %17, %cst_14 {dimension_numbers = #tpu.dot_dimension_numbers<[1], [0], [0], [1], [0, 0, 1, 1], [], []>} : vector<128x128xbf16>, vector<128x128xbf16>, vector<128x128xf32> -> vector<128x128xf32>
    %19 = vector.broadcast %1 : vector<128x1xf32> to vector<128x128xf32>
    %20 = arith.mulf %18, %19 : vector<128x128xf32>
    %c0_15 = arith.constant 0 : index
    %c0_16 = arith.constant 0 : index
    %21 = vector.load %arg6[%c0_15, %c0_16] : memref<128x128xbf16, #tpu.memory_space<vmem>>, vector<128x128xbf16>
    %cst_17 = arith.constant dense<0.000000e+00> : vector<128x128xf32>
    %22 = tpu.matmul %17, %21, %cst_17 {dimension_numbers = #tpu.dot_dimension_numbers<[1], [0], [0], [1], [0, 0, 1, 1], [], []>} : vector<128x128xbf16>, vector<128x128xbf16>, vector<128x128xf32> -> vector<128x128xf32>
    %23 = arith.truncf %20 : vector<128x128xf32> to vector<128x128xbf16>
    %c0_18 = arith.constant 0 : index
    %c0_19 = arith.constant 0 : index
    %24 = vector.load %arg7[%c0_18, %c0_19] : memref<128x128xbf16, #tpu.memory_space<vmem>>, vector<128x128xbf16>
    %cst_20 = arith.constant dense<0.000000e+00> : vector<128x128xf32>
    %25 = tpu.matmul %23, %24, %cst_20 {dimension_numbers = #tpu.dot_dimension_numbers<[1], [0], [0], [1], [0, 0, 1, 1], [], []>} : vector<128x128xbf16>, vector<128x128xbf16>, vector<128x128xf32> -> vector<128x128xf32>
    %26 = arith.addf %22, %25 : vector<128x128xf32>
    %c0_21 = arith.constant 0 : index
    %c0_22 = arith.constant 0 : index
    %27 = vector.load %arg8[%c0_21, %c0_22] : memref<1x128xf32, #tpu.memory_space<vmem>>, vector<1x128xf32>
    %28 = vector.broadcast %27 : vector<1x128xf32> to vector<128x128xf32>
    %29 = arith.addf %26, %28 : vector<128x128xf32>
    %c0_23 = arith.constant 0 : index
    %c0_24 = arith.constant 0 : index
    %30 = vector.load %arg9[%c0_23, %c0_24] : memref<128x128xf32, #tpu.memory_space<vmem>>, vector<128x128xf32>
    tpu.vector_store %arg9[%c0_23, %c0_24], %29 {strides = array<i32>} : memref<128x128xf32, #tpu.memory_space<vmem>>, vector<128x128xf32>,
    return
  }
}

</mosaic_0001>

<llo_original>
// kernel: tpu_custom_call.1
$region0: #{tpu_custom_call.1}
  #allocation0 [shape = 'u32[]', space=smem, size = 0x4, offset = 0x4, fixed_abs, tag = 'smem constant byte address 0x4 - core index']
  #allocation1 [shape = 'u32[144,128]{1,0:T(1,128)}', space=vmem, size = 0x12000, scoped, tag = 'internal scratch']
  %s0 = inlined_call_operand.vmem [shape: bf16[128,128], index: 0, kind: input, shape index: {}]
  %s1 = inlined_call_operand.vmem [shape: f32[128,1], index: 1, kind: input, shape index: {}]
  %s2 = inlined_call_operand.vmem [shape: bf16[128,128], index: 2, kind: input, shape index: {}]
  %s3 = inlined_call_operand.hbm [shape: bf16[128,128], index: 3, kind: input, shape index: {}]
  %s4 = inlined_call_operand.hbm [shape: bf16[128,128], index: 4, kind: input, shape index: {}]
  %s5 = inlined_call_operand.vmem [shape: f32[1,128], index: 5, kind: input, shape index: {}]
  %s6 = inlined_call_operand.hbm [shape: bf16[128,128], index: 6, kind: input, shape index: {}]
  %s7 = inlined_call_operand.hbm [shape: bf16[128,128], index: 7, kind: input, shape index: {}]
  %s8 = inlined_call_operand.vmem [shape: f32[1,128], index: 8, kind: input, shape index: {}]
  %s9 = inlined_call_operand.hbm [shape: f32[128,128], index: 9, kind: output, shape index: {}]
  %s10 = sld [smem:[#allocation0]]
  $region62: #{tpu_custom_call.1} parent=0
    _
  %s12 = ssub.s32 1, %s10
  %s13 = scalar_select 0, %s12, %s10
  $region1: #{tpu_custom_call.1} parent=0
    #allocation2 [shape = 'u8[32768]{0}', space=vmem, size = 0x8000, scoped, tag = 'input window, operand 3, single buffered']
    #allocation3 [shape = 's32[1]{0}', space=sflag, size = 0x4, scoped, tag = 'scoped memory for tpu_custom_call.1']
    #allocation4 [shape = 's32[1]{0}', space=sflag, size = 0x4, scoped, tag = 'scoped memory for tpu_custom_call.1']
    #allocation5 [shape = 'u8[32768]{0}', space=vmem, size = 0x8000, scoped, tag = 'input window, operand 4, single buffered']
    #allocation6 [shape = 's32[1]{0}', space=sflag, size = 0x4, scoped, tag = 'scoped memory for tpu_custom_call.1']
    #allocation7 [shape = 'u8[32768]{0}', space=vmem, size = 0x8000, scoped, tag = 'input window, operand 6, single buffered']
    #allocation8 [shape = 'u8[32768]{0}', space=vmem, size = 0x8000, scoped, tag = 'input window, operand 7, single buffered']
    #allocation9 [shape = 's32[1]{0}', space=sflag, size = 0x4, scoped, tag = 'scoped memory for tpu_custom_call.1']
    #allocation10 [shape = 'u8[65536]{0}', space=vmem, size = 0x10000, scoped, tag = 'output window, operand 0, single buffered']
    %14 = vsyncpa [#allocation3], 0
    %15 = vsyncpa [#allocation6], 0
    %16 = vsyncpa [#allocation9], 0
    %17 = vsyncpa [#allocation4], 0
    // Predicated region
    $region2: #{tpu_custom_call.1} parent=1 // pred_check
      _
    $region3: #{tpu_custom_call.1} parent=1 // pred_check_branch
      %19 = sbr.rel (0) target = $region5
    $region4: #{tpu_custom_call.1} parent=1 // pred_region
      _
    $region5: #{tpu_custom_call.1} parent=1 // pred_fallthru
      _
    // Predicated region
    $region6: #{tpu_custom_call.1} parent=1 // pred_check
      _
    $region7: #{tpu_custom_call.1} parent=1 // pred_check_branch
      %21 = sbr.rel (0) target = $region9
    $region8: #{tpu_custom_call.1} parent=1 // pred_region
      _
    $region9: #{tpu_custom_call.1} parent=1 // pred_fallthru
      _
    // Predicated region
    $region10: #{tpu_custom_call.1} parent=1 // pred_check
      _
    $region11: #{tpu_custom_call.1} parent=1 // pred_check_branch
      %23 = sbr.rel (0) target = $region13
    $region12: #{tpu_custom_call.1} parent=1 // pred_region
      _
    $region13: #{tpu_custom_call.1} parent=1 // pred_fallthru
      _
    // Predicated region
    $region14: #{tpu_custom_call.1} parent=1 // pred_check
      _
    $region15: #{tpu_custom_call.1} parent=1 // pred_check_branch
      %25 = sbr.rel (0) target = $region17
    $region16: #{tpu_custom_call.1} parent=1 // pred_region
      %s27 = ssub.s32 1024, 1024
      %28 = vsyncadd [#allocation3], %s27
      %s29 = sshll.u32 [#allocation2], 4
      %s30 = int_to_ptr.vmem [resolvable:$true] %s29
      %35 = dma.hbm_to_vmem [thread:$0]  %s3, 1024, %s30, [#allocation3], 64, 64, 4
    $region17: #{tpu_custom_call.1} parent=1 // pred_fallthru
      _
    // Predicated region
    $region18: #{tpu_custom_call.1} parent=1 // pred_check
      _
    $region19: #{tpu_custom_call.1} parent=1 // pred_check_branch
      %37 = sbr.rel (0) target = $region21
    $region20: #{tpu_custom_call.1} parent=1 // pred_region
      %s39 = ssub.s32 1024, 1024
      %40 = vsyncadd [#allocation6], %s39
      %s41 = sshll.u32 [#allocation5], 4
      %s42 = int_to_ptr.vmem [resolvable:$true] %s41
      %47 = dma.hbm_to_vmem [thread:$0]  %s4, 1024, %s42, [#allocation6], 64, 64, 4
    $region21: #{tpu_custom_call.1} parent=1 // pred_fallthru
      _
    // Predicated region
    $region22: #{tpu_custom_call.1} parent=1 // pred_check
      _
    $region23: #{tpu_custom_call.1} parent=1 // pred_check_branch
      %49 = sbr.rel (0) target = $region25
    $region24: #{tpu_custom_call.1} parent=1 // pred_region
      _
    $region25: #{tpu_custom_call.1} parent=1 // pred_fallthru
      _
    // Predicated region
    $region26: #{tpu_custom_call.1} parent=1 // pred_check
      _
    $region27: #{tpu_custom_call.1} parent=1 // pred_check_branch
      %51 = sbr.rel (0) target = $region29
    $region28: #{tpu_custom_call.1} parent=1 // pred_region
      %s53 = ssub.s32 1024, 1024
      %54 = vsyncadd [#allocation6], %s53
      %s55 = sshll.u32 [#allocation7], 4
      %s56 = int_to_ptr.vmem [resolvable:$true] %s55
      %61 = dma.hbm_to_vmem [thread:$0]  %s6, 1024, %s56, [#allocation6], 64, 64, 4
    $region29: #{tpu_custom_call.1} parent=1 // pred_fallthru
      _
    // Predicated region
    $region30: #{tpu_custom_call.1} parent=1 // pred_check
      _
    $region31: #{tpu_custom_call.1} parent=1 // pred_check_branch
      %63 = sbr.rel (0) target = $region33
    $region32: #{tpu_custom_call.1} parent=1 // pred_region
      %s65 = ssub.s32 1024, 1024
      %66 = vsyncadd [#allocation9], %s65
      %s67 = sshll.u32 [#allocation8], 4
      %s68 = int_to_ptr.vmem [resolvable:$true] %s67
      %73 = dma.hbm_to_vmem [thread:$0]  %s7, 1024, %s68, [#allocation9], 64, 64, 4
    $region33: #{tpu_custom_call.1} parent=1 // pred_fallthru
      _
    // Predicated region
    $region34: #{tpu_custom_call.1} parent=1 // pred_check
      _
    $region35: #{tpu_custom_call.1} parent=1 // pred_check_branch
      %75 = sbr.rel (0) target = $region37
    $region36: #{tpu_custom_call.1} parent=1 // pred_region
      _
    $region37: #{tpu_custom_call.1} parent=1 // pred_fallthru
      _
    // Predicated region
    $region38: #{tpu_custom_call.1} parent=1 // pred_check
      _
    $region39: #{tpu_custom_call.1} parent=1 // pred_check_branch
      %77 = sbr.rel (0) target = $region41
    $region40: #{tpu_custom_call.1} parent=1 // pred_region
      %78 = dma.done [#allocation3], 1024
    $region41: #{tpu_custom_call.1} parent=1 // pred_fallthru
      _
    // Predicated region
    $region42: #{tpu_custom_call.1} parent=1 // pred_check
      _
    $region43: #{tpu_custom_call.1} parent=1 // pred_check_branch
      %80 = sbr.rel (0) target = $region45
    $region44: #{tpu_custom_call.1} parent=1 // pred_region
      %81 = dma.done [#allocation6], 1024
    $region45: #{tpu_custom_call.1} parent=1 // pred_fallthru
      _
    // Predicated region
    $region46: #{tpu_custom_call.1} parent=1 // pred_check
      _
    $region47: #{tpu_custom_call.1} parent=1 // pred_check_branch
      %83 = sbr.rel (0) target = $region49
    $region48: #{tpu_custom_call.1} parent=1 // pred_region
      %84 = dma.done [#allocation6], 1024
    $region49: #{tpu_custom_call.1} parent=1 // pred_fallthru
      _
    // Predicated region
    $region50: #{tpu_custom_call.1} parent=1 // pred_check
      _
    $region51: #{tpu_custom_call.1} parent=1 // pred_check_branch
      %86 = sbr.rel (0) target = $region53
    $region52: #{tpu_custom_call.1} parent=1 // pred_region
      %87 = dma.done [#allocation9], 1024
    $region53: #{tpu_custom_call.1} parent=1 // pred_fallthru
      _
    %v89 = vld [vmem:[%s0] sm:$0xf]
    %v90 = vld [vmem:[%s0 + $0x4] sm:$0xf]
    %v91 = vld [vmem:[%s0 + $0x8] sm:$0xf]
    %v92 = vld [vmem:[%s0 + $0xc] sm:$0xf]
    %v93 = vld [vmem:[%s0 + $0x10] sm:$0xf]
    %v94 = vld [vmem:[%s0 + $0x14] sm:$0xf]
    %v95 = vld [vmem:[%s0 + $0x18] sm:$0xf]
    %v96 = vld [vmem:[%s0 + $0x1c] sm:$0xf]
    %v97 = vld [vmem:[%s0 + $0x20] sm:$0xf]
    %v98 = vld [vmem:[%s0 + $0x24] sm:$0xf]
    %v99 = vld [vmem:[%s0 + $0x28] sm:$0xf]
    %v100 = vld [vmem:[%s0 + $0x2c] sm:$0xf]
    %v101 = vld [vmem:[%s0 + $0x30] sm:$0xf]
    %v102 = vld [vmem:[%s0 + $0x34] sm:$0xf]
    %v103 = vld [vmem:[%s0 + $0x38] sm:$0xf]
    %v104 = vld [vmem:[%s0 + $0x3c] sm:$0xf]
    %v105 = vld [vmem:[%s1] sm:$0xff]
    %v106 = vld [vmem:[%s1 + $0x8] sm:$0xff]
    %v107 = vld [vmem:[%s1 + $0x10] sm:$0xff]
    %v108 = vld [vmem:[%s1 + $0x18] sm:$0xff]
    %v109 = vld [vmem:[%s1 + $0x20] sm:$0xff]
    %v110 = vld [vmem:[%s1 + $0x28] sm:$0xff]
    %v111 = vld [vmem:[%s1 + $0x30] sm:$0xff]
    %v112 = vld [vmem:[%s1 + $0x38] sm:$0xff]
    %v113 = vld [vmem:[%s1 + $0x40] sm:$0xff]
    %v114 = vld [vmem:[%s1 + $0x48] sm:$0xff]
    %v115 = vld [vmem:[%s1 + $0x50] sm:$0xff]
    %v116 = vld [vmem:[%s1 + $0x58] sm:$0xff]
    %v117 = vld [vmem:[%s1 + $0x60] sm:$0xff]
    %v118 = vld [vmem:[%s1 + $0x68] sm:$0xff]
    %v119 = vld [vmem:[%s1 + $0x70] sm:$0xff]
    %v120 = vld [vmem:[%s1 + $0x78] sm:$0xff]
    %v121 = vld [vmem:[%s2] sm:$0xf]
    %v122 = vld [vmem:[%s2 + $0x4] sm:$0xf]
    %v123 = vld [vmem:[%s2 + $0x8] sm:$0xf]
    %v124 = vld [vmem:[%s2 + $0xc] sm:$0xf]
    %v125 = vld [vmem:[%s2 + $0x10] sm:$0xf]
    %v126 = vld [vmem:[%s2 + $0x14] sm:$0xf]
    %v127 = vld [vmem:[%s2 + $0x18] sm:$0xf]
    %v128 = vld [vmem:[%s2 + $0x1c] sm:$0xf]
    %v129 = vld [vmem:[%s2 + $0x20] sm:$0xf]
    %v130 = vld [vmem:[%s2 + $0x24] sm:$0xf]
    %v131 = vld [vmem:[%s2 + $0x28] sm:$0xf]
    %v132 = vld [vmem:[%s2 + $0x2c] sm:$0xf]
    %v133 = vld [vmem:[%s2 + $0x30] sm:$0xf]
    %v134 = vld [vmem:[%s2 + $0x34] sm:$0xf]
    %v135 = vld [vmem:[%s2 + $0x38] sm:$0xf]
    %v136 = vld [vmem:[%s2 + $0x3c] sm:$0xf]
    %v153 = vunpack.c.l.b16 %v89
    %v154 = vunpack.c.l.b16 %v90
    %v155 = vunpack.c.l.b16 %v91
    %v156 = vunpack.c.l.b16 %v92
    %v157 = vunpack.c.l.b16 %v93
    %v158 = vunpack.c.l.b16 %v94
    %v159 = vunpack.c.l.b16 %v95
    %v160 = vunpack.c.l.b16 %v96
    %v161 = vunpack.c.l.b16 %v97
    %v162 = vunpack.c.l.b16 %v98
    %v163 = vunpack.c.l.b16 %v99
    %v164 = vunpack.c.l.b16 %v100
    %v165 = vunpack.c.l.b16 %v101
    %v166 = vunpack.c.l.b16 %v102
    %v167 = vunpack.c.l.b16 %v103
    %v168 = vunpack.c.l.b16 %v104
    %v169 = vpack.c.b16 %v154, %v153
    %v170 = vpack.c.b16 %v156, %v155
    %v171 = vpack.c.b16 %v158, %v157
    %v172 = vpack.c.b16 %v160, %v159
    %v173 = vpack.c.b16 %v162, %v161
    %v174 = vpack.c.b16 %v164, %v163
    %v175 = vpack.c.b16 %v166, %v165
    %v176 = vpack.c.b16 %v168, %v167
    %v201 = vunpack.c.l.b16 %v121
    %v202 = vunpack.c.l.b16 %v122
    %v203 = vunpack.c.l.b16 %v123
    %v204 = vunpack.c.l.b16 %v124
    %v205 = vunpack.c.l.b16 %v125
    %v206 = vunpack.c.l.b16 %v126
    %v207 = vunpack.c.l.b16 %v127
    %v208 = vunpack.c.l.b16 %v128
    %v209 = vunpack.c.l.b16 %v129
    %v210 = vunpack.c.l.b16 %v130
    %v211 = vunpack.c.l.b16 %v131
    %v212 = vunpack.c.l.b16 %v132
    %v213 = vunpack.c.l.b16 %v133
    %v214 = vunpack.c.l.b16 %v134
    %v215 = vunpack.c.l.b16 %v135
    %v216 = vunpack.c.l.b16 %v136
    %v217 = vpack.c.b16 %v202, %v201
    %v218 = vpack.c.b16 %v204, %v203
    %v219 = vpack.c.b16 %v206, %v205
    %v220 = vpack.c.b16 %v208, %v207
    %v221 = vpack.c.b16 %v210, %v209
    %v222 = vpack.c.b16 %v212, %v211
    %v223 = vpack.c.b16 %v214, %v213
    %v224 = vpack.c.b16 %v216, %v215
    %233 = vmatprep.subr.bf16.mxu0 0
    %234 = vmatpush1.bf16.msra.mxu0 %v217
    %235 = vmatprep.subr.bf16.mxu0 0
    %236 = vmatpush1.bf16.msra.mxu0 %v218
    %237 = vmatprep.subr.bf16.mxu0 0
    %238 = vmatpush1.bf16.msra.mxu0 %v219
    %239 = vmatprep.subr.bf16.mxu0 0
    %240 = vmatpush1.bf16.msra.mxu0 %v220
    %241 = vmatprep.subr.bf16.mxu0 0
    %242 = vmatpush1.bf16.msra.mxu0 %v221
    %243 = vmatprep.subr.bf16.mxu0 0
    %244 = vmatpush1.bf16.msra.mxu0 %v222
    %245 = vmatprep.subr.bf16.mxu0 0
    %246 = vmatpush1.bf16.msra.mxu0 %v223
    %247 = vmatprep.subr.bf16.mxu0 0
    %248 = vmatpush1.bf16.msra.mxu0 %v224
    %249 = vmatprep.subr.bf16.mxu0 0
    %250 = vmatpush1.bf16.msra.mxu0 0
    %251 = vmatprep.subr.bf16.mxu0 0
    %252 = vmatpush1.bf16.msra.mxu0 0
    %253 = vmatprep.subr.bf16.mxu0 0
    %254 = vmatpush1.bf16.msra.mxu0 0
    %255 = vmatprep.subr.bf16.mxu0 0
    %256 = vmatpush1.bf16.msra.mxu0 0
    %257 = vmatprep.subr.bf16.mxu0 0
    %258 = vmatpush1.bf16.msra.mxu0 0
    %259 = vmatprep.subr.bf16.mxu0 0
    %260 = vmatpush1.bf16.msra.mxu0 0
    %261 = vmatprep.subr.bf16.mxu0 0
    %262 = vmatpush1.bf16.msra.mxu0 0
    %263 = vmatprep.subr.bf16.mxu0 0
    %264 = vmatpush1.bf16.msra.mxu0 0
    %265 = vmatprep.mubr.bf16.mxu0 0
    %266 = vmatmul.mubr.bf16.gmra.mrb[0].mxu0 %v169
    %v267 = vpop.f32.mrb[0].mxu0
    %v268 = vadd.f32 0.0, %v267
    %v269 = vpop.f32.mrb[0].mxu0
    %v270 = vpop.f32.mrb[0].mxu0
    %v271 = vadd.f32 0.0, %v270
    %v272 = vpop.f32.mrb[0].mxu0
    %273 = vmatprep.mubr.bf16.mxu0 0
    %274 = vmatmul.mubr.bf16.gmra.mrb[0].mxu0 %v170
    %v275 = vpop.f32.mrb[0].mxu0
    %v276 = vadd.f32 0.0, %v275
    %v277 = vpop.f32.mrb[0].mxu0
    %v278 = vpop.f32.mrb[0].mxu0
    %v279 = vadd.f32 0.0, %v278
    %v280 = vpop.f32.mrb[0].mxu0
    %281 = vmatprep.mubr.bf16.mxu0 0
    %282 = vmatmul.mubr.bf16.gmra.mrb[0].mxu0 %v171
    %v283 = vpop.f32.mrb[0].mxu0
    %v284 = vadd.f32 0.0, %v283
    %v285 = vpop.f32.mrb[0].mxu0
    %v286 = vpop.f32.mrb[0].mxu0
    %v287 = vadd.f32 0.0, %v286
    %v288 = vpop.f32.mrb[0].mxu0
    %289 = vmatprep.mubr.bf16.mxu0 0
    %290 = vmatmul.mubr.bf16.gmra.mrb[0].mxu0 %v172
    %v291 = vpop.f32.mrb[0].mxu0
    %v292 = vadd.f32 0.0, %v291
    %v293 = vpop.f32.mrb[0].mxu0
    %v294 = vpop.f32.mrb[0].mxu0
    %v295 = vadd.f32 0.0, %v294
    %v296 = vpop.f32.mrb[0].mxu0
    %297 = vmatprep.mubr.bf16.mxu0 0
    %298 = vmatmul.mubr.bf16.gmra.mrb[0].mxu0 %v173
    %v299 = vpop.f32.mrb[0].mxu0
    %v300 = vadd.f32 0.0, %v299
    %v301 = vpop.f32.mrb[0].mxu0
    %v302 = vpop.f32.mrb[0].mxu0
    %v303 = vadd.f32 0.0, %v302
    %v304 = vpop.f32.mrb[0].mxu0
    %305 = vmatprep.mubr.bf16.mxu0 0
    %306 = vmatmul.mubr.bf16.gmra.mrb[0].mxu0 %v174
    %v307 = vpop.f32.mrb[0].mxu0
    %v308 = vadd.f32 0.0, %v307
    %v309 = vpop.f32.mrb[0].mxu0
    %v310 = vpop.f32.mrb[0].mxu0
    %v311 = vadd.f32 0.0, %v310
    %v312 = vpop.f32.mrb[0].mxu0
    %313 = vmatprep.mubr.bf16.mxu0 0
    %314 = vmatmul.mubr.bf16.gmra.mrb[0].mxu0 %v175
    %v315 = vpop.f32.mrb[0].mxu0
    %v316 = vadd.f32 0.0, %v315
    %v317 = vpop.f32.mrb[0].mxu0
    %v318 = vpop.f32.mrb[0].mxu0
    %v319 = vadd.f32 0.0, %v318
    %v320 = vpop.f32.mrb[0].mxu0
    %321 = vmatprep.mubr.bf16.mxu0 0
    %322 = vmatmul.mubr.bf16.gmra.mrb[0].mxu0 %v176
    %v323 = vpop.f32.mrb[0].mxu0
    %v324 = vadd.f32 0.0, %v323
    %v325 = vpop.f32.mrb[0].mxu0
    %v326 = vpop.f32.mrb[0].mxu0
    %v327 = vadd.f32 0.0, %v326
    %v328 = vpop.f32.mrb[0].mxu0
    %329 = vdwg.mxu0
    %331 = vset.pattern.permute.xlu0 0
    %332 = vperm.xlu0 %331, %v105
    %v333 = vpop.permute.xlu0 %332
    %336 = vset.pattern.permute.xlu0 0
    %337 = vperm.xlu0 %336, %v106
    %v338 = vpop.permute.xlu0 %337
    %341 = vset.pattern.permute.xlu0 0
    %342 = vperm.xlu0 %341, %v107
    %v343 = vpop.permute.xlu0 %342
    %346 = vset.pattern.permute.xlu0 0
    %347 = vperm.xlu0 %346, %v108
    %v348 = vpop.permute.xlu0 %347
    %351 = vset.pattern.permute.xlu0 0
    %352 = vperm.xlu0 %351, %v109
    %v353 = vpop.permute.xlu0 %352
    %356 = vset.pattern.permute.xlu0 0
    %357 = vperm.xlu0 %356, %v110
    %v358 = vpop.permute.xlu0 %357
    %361 = vset.pattern.permute.xlu0 0
    %362 = vperm.xlu0 %361, %v111
    %v363 = vpop.permute.xlu0 %362
    %366 = vset.pattern.permute.xlu0 0
    %367 = vperm.xlu0 %366, %v112
    %v368 = vpop.permute.xlu0 %367
    %371 = vset.pattern.permute.xlu0 0
    %372 = vperm.xlu0 %371, %v113
    %v373 = vpop.permute.xlu0 %372
    %376 = vset.pattern.permute.xlu0 0
    %377 = vperm.xlu0 %376, %v114
    %v378 = vpop.permute.xlu0 %377
    %381 = vset.pattern.permute.xlu0 0
    %382 = vperm.xlu0 %381, %v115
    %v383 = vpop.permute.xlu0 %382
    %386 = vset.pattern.permute.xlu0 0
    %387 = vperm.xlu0 %386, %v116
    %v388 = vpop.permute.xlu0 %387
    %391 = vset.pattern.permute.xlu0 0
    %392 = vperm.xlu0 %391, %v117
    %v393 = vpop.permute.xlu0 %392
    %396 = vset.pattern.permute.xlu0 0
    %397 = vperm.xlu0 %396, %v118
    %v398 = vpop.permute.xlu0 %397
    %401 = vset.pattern.permute.xlu0 0
    %402 = vperm.xlu0 %401, %v119
    %v403 = vpop.permute.xlu0 %402
    %406 = vset.pattern.permute.xlu0 0
    %407 = vperm.xlu0 %406, %v120
    %v408 = vpop.permute.xlu0 %407
    %v410 = vmul.f32 %v268, %v333
    %v411 = vmul.f32 %v271, %v338
    %v412 = vmul.f32 %v276, %v343
    %v413 = vmul.f32 %v279, %v348
    %v414 = vmul.f32 %v284, %v353
    %v415 = vmul.f32 %v287, %v358
    %v416 = vmul.f32 %v292, %v363
    %v417 = vmul.f32 %v295, %v368
    %v418 = vmul.f32 %v300, %v373
    %v419 = vmul.f32 %v303, %v378
    %v420 = vmul.f32 %v308, %v383
    %v421 = vmul.f32 %v311, %v388
    %v422 = vmul.f32 %v316, %v393
    %v423 = vmul.f32 %v319, %v398
    %v424 = vmul.f32 %v324, %v403
    %v425 = vmul.f32 %v327, %v408
    %v426 = vld [vmem:[#allocation2] sm:$0xf]
    %v427 = vld [vmem:[#allocation2 + $0x4] sm:$0xf]
    %v428 = vld [vmem:[#allocation2 + $0x8] sm:$0xf]
    %v429 = vld [vmem:[#allocation2 + $0xc] sm:$0xf]
    %v430 = vld [vmem:[#allocation2 + $0x10] sm:$0xf]
    %v431 = vld [vmem:[#allocation2 + $0x14] sm:$0xf]
    %v432 = vld [vmem:[#allocation2 + $0x18] sm:$0xf]
    %v433 = vld [vmem:[#allocation2 + $0x1c] sm:$0xf]
    %v434 = vld [vmem:[#allocation2 + $0x20] sm:$0xf]
    %v435 = vld [vmem:[#allocation2 + $0x24] sm:$0xf]
    %v436 = vld [vmem:[#allocation2 + $0x28] sm:$0xf]
    %v437 = vld [vmem:[#allocation2 + $0x2c] sm:$0xf]
    %v438 = vld [vmem:[#allocation2 + $0x30] sm:$0xf]
    %v439 = vld [vmem:[#allocation2 + $0x34] sm:$0xf]
    %v440 = vld [vmem:[#allocation2 + $0x38] sm:$0xf]
    %v441 = vld [vmem:[#allocation2 + $0x3c] sm:$0xf]
    %v442 = vpack.c.bf16 %v411, %v410
    %v443 = vpack.c.bf16 %v413, %v412
    %v444 = vpack.c.bf16 %v415, %v414
    %v445 = vpack.c.bf16 %v417, %v416
    %v446 = vpack.c.bf16 %v419, %v418
    %v447 = vpack.c.bf16 %v421, %v420
    %v448 = vpack.c.bf16 %v423, %v422
    %v449 = vpack.c.bf16 %v425, %v424
    %v450 = vld [vmem:[#allocation5] sm:$0xf]
    %v451 = vld [vmem:[#allocation5 + $0x4] sm:$0xf]
    %v452 = vld [vmem:[#allocation5 + $0x8] sm:$0xf]
    %v453 = vld [vmem:[#allocation5 + $0xc] sm:$0xf]
    %v454 = vld [vmem:[#allocation5 + $0x10] sm:$0xf]
    %v455 = vld [vmem:[#allocation5 + $0x14] sm:$0xf]
    %v456 = vld [vmem:[#allocation5 + $0x18] sm:$0xf]
    %v457 = vld [vmem:[#allocation5 + $0x1c] sm:$0xf]
    %v458 = vld [vmem:[#allocation5 + $0x20] sm:$0xf]
    %v459 = vld [vmem:[#allocation5 + $0x24] sm:$0xf]
    %v460 = vld [vmem:[#allocation5 + $0x28] sm:$0xf]
    %v461 = vld [vmem:[#allocation5 + $0x2c] sm:$0xf]
    %v462 = vld [vmem:[#allocation5 + $0x30] sm:$0xf]
    %v463 = vld [vmem:[#allocation5 + $0x34] sm:$0xf]
    %v464 = vld [vmem:[#allocation5 + $0x38] sm:$0xf]
    %v465 = vld [vmem:[#allocation5 + $0x3c] sm:$0xf]
    %v482 = vunpack.c.l.b16 %v450
    %v483 = vunpack.c.l.b16 %v451
    %v484 = vunpack.c.l.b16 %v452
    %v485 = vunpack.c.l.b16 %v453
    %v486 = vunpack.c.l.b16 %v454
    %v487 = vunpack.c.l.b16 %v455
    %v488 = vunpack.c.l.b16 %v456
    %v489 = vunpack.c.l.b16 %v457
    %v490 = vunpack.c.l.b16 %v458
    %v491 = vunpack.c.l.b16 %v459
    %v492 = vunpack.c.l.b16 %v460
    %v493 = vunpack.c.l.b16 %v461
    %v494 = vunpack.c.l.b16 %v462
    %v495 = vunpack.c.l.b16 %v463
    %v496 = vunpack.c.l.b16 %v464
    %v497 = vunpack.c.l.b16 %v465
    %v498 = vpack.c.b16 %v483, %v482
    %v499 = vpack.c.b16 %v485, %v484
    %v500 = vpack.c.b16 %v487, %v486
    %v501 = vpack.c.b16 %v489, %v488
    %v502 = vpack.c.b16 %v491, %v490
    %v503 = vpack.c.b16 %v493, %v492
    %v504 = vpack.c.b16 %v495, %v494
    %v505 = vpack.c.b16 %v497, %v496
    %514 = vmatprep.subr.bf16.mxu0 0
    %515 = vmatpush1.bf16.msra.mxu0 %v498
    %516 = vmatprep.subr.bf16.mxu0 0
    %517 = vmatpush1.bf16.msra.mxu0 %v499
    %518 = vmatprep.subr.bf16.mxu0 0
    %519 = vmatpush1.bf16.msra.mxu0 %v500
    %520 = vmatprep.subr.bf16.mxu0 0
    %521 = vmatpush1.bf16.msra.mxu0 %v501
    %522 = vmatprep.subr.bf16.mxu0 0
    %523 = vmatpush1.bf16.msra.mxu0 %v502
    %524 = vmatprep.subr.bf16.mxu0 0
    %525 = vmatpush1.bf16.msra.mxu0 %v503
    %526 = vmatprep.subr.bf16.mxu0 0
    %527 = vmatpush1.bf16.msra.mxu0 %v504
    %528 = vmatprep.subr.bf16.mxu0 0
    %529 = vmatpush1.bf16.msra.mxu0 %v505
    %530 = vmatprep.subr.bf16.mxu0 0
    %531 = vmatpush1.bf16.msra.mxu0 0
    %532 = vmatprep.subr.bf16.mxu0 0
    %533 = vmatpush1.bf16.msra.mxu0 0
    %534 = vmatprep.subr.bf16.mxu0 0
    %535 = vmatpush1.bf16.msra.mxu0 0
    %536 = vmatprep.subr.bf16.mxu0 0
    %537 = vmatpush1.bf16.msra.mxu0 0
    %538 = vmatprep.subr.bf16.mxu0 0
    %539 = vmatpush1.bf16.msra.mxu0 0
    %540 = vmatprep.subr.bf16.mxu0 0
    %541 = vmatpush1.bf16.msra.mxu0 0
    %542 = vmatprep.subr.bf16.mxu0 0
    %543 = vmatpush1.bf16.msra.mxu0 0
    %544 = vmatprep.subr.bf16.mxu0 0
    %545 = vmatpush1.bf16.msra.mxu0 0
    %546 = vmatprep.mubr.bf16.mxu0 0
    %547 = vmatmul.mubr.bf16.gmra.mrb[0].mxu0 %v442
    %v548 = vpop.f32.mrb[0].mxu0
    %v549 = vadd.f32 0.0, %v548
    %v550 = vpop.f32.mrb[0].mxu0
    %v551 = vpop.f32.mrb[0].mxu0
    %v552 = vadd.f32 0.0, %v551
    %v553 = vpop.f32.mrb[0].mxu0
    %554 = vmatprep.mubr.bf16.mxu0 0
    %555 = vmatmul.mubr.bf16.gmra.mrb[0].mxu0 %v443
    %v556 = vpop.f32.mrb[0].mxu0
    %v557 = vadd.f32 0.0, %v556
    %v558 = vpop.f32.mrb[0].mxu0
    %v559 = vpop.f32.mrb[0].mxu0
    %v560 = vadd.f32 0.0, %v559
    %v561 = vpop.f32.mrb[0].mxu0
    %562 = vmatprep.mubr.bf16.mxu0 0
    %563 = vmatmul.mubr.bf16.gmra.mrb[0].mxu0 %v444
    %v564 = vpop.f32.mrb[0].mxu0
    %v565 = vadd.f32 0.0, %v564
    %v566 = vpop.f32.mrb[0].mxu0
    %v567 = vpop.f32.mrb[0].mxu0
    %v568 = vadd.f32 0.0, %v567
    %v569 = vpop.f32.mrb[0].mxu0
    %570 = vmatprep.mubr.bf16.mxu0 0
    %571 = vmatmul.mubr.bf16.gmra.mrb[0].mxu0 %v445
    %v572 = vpop.f32.mrb[0].mxu0
    %v573 = vadd.f32 0.0, %v572
    %v574 = vpop.f32.mrb[0].mxu0
    %v575 = vpop.f32.mrb[0].mxu0
    %v576 = vadd.f32 0.0, %v575
    %v577 = vpop.f32.mrb[0].mxu0
    %578 = vmatprep.mubr.bf16.mxu0 0
    %579 = vmatmul.mubr.bf16.gmra.mrb[0].mxu0 %v446
    %v580 = vpop.f32.mrb[0].mxu0
    %v581 = vadd.f32 0.0, %v580
    %v582 = vpop.f32.mrb[0].mxu0
    %v583 = vpop.f32.mrb[0].mxu0
    %v584 = vadd.f32 0.0, %v583
    %v585 = vpop.f32.mrb[0].mxu0
    %586 = vmatprep.mubr.bf16.mxu0 0
    %587 = vmatmul.mubr.bf16.gmra.mrb[0].mxu0 %v447
    %v588 = vpop.f32.mrb[0].mxu0
    %v589 = vadd.f32 0.0, %v588
    %v590 = vpop.f32.mrb[0].mxu0
    %v591 = vpop.f32.mrb[0].mxu0
    %v592 = vadd.f32 0.0, %v591
    %v593 = vpop.f32.mrb[0].mxu0
    %594 = vmatprep.mubr.bf16.mxu0 0
    %595 = vmatmul.mubr.bf16.gmra.mrb[0].mxu0 %v448
    %v596 = vpop.f32.mrb[0].mxu0
    %v597 = vadd.f32 0.0, %v596
    %v598 = vpop.f32.mrb[0].mxu0
    %v599 = vpop.f32.mrb[0].mxu0
    %v600 = vadd.f32 0.0, %v599
    %v601 = vpop.f32.mrb[0].mxu0
    %602 = vmatprep.mubr.bf16.mxu0 0
    %603 = vmatmul.mubr.bf16.gmra.mrb[0].mxu0 %v449
    %v604 = vpop.f32.mrb[0].mxu0
    %v605 = vadd.f32 0.0, %v604
    %v606 = vpop.f32.mrb[0].mxu0
    %v607 = vpop.f32.mrb[0].mxu0
    %v608 = vadd.f32 0.0, %v607
    %v609 = vpop.f32.mrb[0].mxu0
    %610 = vdwg.mxu0
    %v627 = vunpack.c.l.b16 %v426
    %v628 = vunpack.c.l.b16 %v427
    %v629 = vunpack.c.l.b16 %v428
    %v630 = vunpack.c.l.b16 %v429
    %v631 = vunpack.c.l.b16 %v430
    %v632 = vunpack.c.l.b16 %v431
    %v633 = vunpack.c.l.b16 %v432
    %v634 = vunpack.c.l.b16 %v433
    %v635 = vunpack.c.l.b16 %v434
    %v636 = vunpack.c.l.b16 %v435
    %v637 = vunpack.c.l.b16 %v436
    %v638 = vunpack.c.l.b16 %v437
    %v639 = vunpack.c.l.b16 %v438
    %v640 = vunpack.c.l.b16 %v439
    %v641 = vunpack.c.l.b16 %v440
    %v642 = vunpack.c.l.b16 %v441
    %v643 = vpack.c.b16 %v628, %v627
    %v644 = vpack.c.b16 %v630, %v629
    %v645 = vpack.c.b16 %v632, %v631
    %v646 = vpack.c.b16 %v634, %v633
    %v647 = vpack.c.b16 %v636, %v635
    %v648 = vpack.c.b16 %v638, %v637
    %v649 = vpack.c.b16 %v640, %v639
    %v650 = vpack.c.b16 %v642, %v641
    %659 = vmatprep.subr.bf16.mxu0 0
    %660 = vmatpush1.bf16.msra.mxu0 %v643
    %661 = vmatprep.subr.bf16.mxu0 0
    %662 = vmatpush1.bf16.msra.mxu0 %v644
    %663 = vmatprep.subr.bf16.mxu0 0
    %664 = vmatpush1.bf16.msra.mxu0 %v645
    %665 = vmatprep.subr.bf16.mxu0 0
    %666 = vmatpush1.bf16.msra.mxu0 %v646
    %667 = vmatprep.subr.bf16.mxu0 0
    %668 = vmatpush1.bf16.msra.mxu0 %v647
    %669 = vmatprep.subr.bf16.mxu0 0
    %670 = vmatpush1.bf16.msra.mxu0 %v648
    %671 = vmatprep.subr.bf16.mxu0 0
    %672 = vmatpush1.bf16.msra.mxu0 %v649
    %673 = vmatprep.subr.bf16.mxu0 0
    %674 = vmatpush1.bf16.msra.mxu0 %v650
    %675 = vmatprep.subr.bf16.mxu0 0
    %676 = vmatpush1.bf16.msra.mxu0 0
    %677 = vmatprep.subr.bf16.mxu0 0
    %678 = vmatpush1.bf16.msra.mxu0 0
    %679 = vmatprep.subr.bf16.mxu0 0
    %680 = vmatpush1.bf16.msra.mxu0 0
    %681 = vmatprep.subr.bf16.mxu0 0
    %682 = vmatpush1.bf16.msra.mxu0 0
    %683 = vmatprep.subr.bf16.mxu0 0
    %684 = vmatpush1.bf16.msra.mxu0 0
    %685 = vmatprep.subr.bf16.mxu0 0
    %686 = vmatpush1.bf16.msra.mxu0 0
    %687 = vmatprep.subr.bf16.mxu0 0
    %688 = vmatpush1.bf16.msra.mxu0 0
    %689 = vmatprep.subr.bf16.mxu0 0
    %690 = vmatpush1.bf16.msra.mxu0 0
    %691 = vmatprep.mubr.bf16.mxu0 0
    %692 = vmatmul.mubr.bf16.gmra.mrb[0].mxu0 %v217
    %v693 = vpop.f32.mrb[0].mxu0
    %v694 = vadd.f32 %v549, %v693
    %v695 = vpop.f32.mrb[0].mxu0
    %v696 = vpop.f32.mrb[0].mxu0
    %v697 = vadd.f32 %v552, %v696
    %v698 = vpop.f32.mrb[0].mxu0
    %699 = vmatprep.mubr.bf16.mxu0 0
    %700 = vmatmul.mubr.bf16.gmra.mrb[0].mxu0 %v218
    %v701 = vpop.f32.mrb[0].mxu0
    %v702 = vadd.f32 %v557, %v701
    %v703 = vpop.f32.mrb[0].mxu0
    %v704 = vpop.f32.mrb[0].mxu0
    %v705 = vadd.f32 %v560, %v704
    %v706 = vpop.f32.mrb[0].mxu0
    %707 = vmatprep.mubr.bf16.mxu0 0
    %708 = vmatmul.mubr.bf16.gmra.mrb[0].mxu0 %v219
    %v709 = vpop.f32.mrb[0].mxu0
    %v710 = vadd.f32 %v565, %v709
    %v711 = vpop.f32.mrb[0].mxu0
    %v712 = vpop.f32.mrb[0].mxu0
    %v713 = vadd.f32 %v568, %v712
    %v714 = vpop.f32.mrb[0].mxu0
    %715 = vmatprep.mubr.bf16.mxu0 0
    %716 = vmatmul.mubr.bf16.gmra.mrb[0].mxu0 %v220
    %v717 = vpop.f32.mrb[0].mxu0
    %v718 = vadd.f32 %v573, %v717
    %v719 = vpop.f32.mrb[0].mxu0
    %v720 = vpop.f32.mrb[0].mxu0
    %v721 = vadd.f32 %v576, %v720
    %v722 = vpop.f32.mrb[0].mxu0
    %723 = vmatprep.mubr.bf16.mxu0 0
    %724 = vmatmul.mubr.bf16.gmra.mrb[0].mxu0 %v221
    %v725 = vpop.f32.mrb[0].mxu0
    %v726 = vadd.f32 %v581, %v725
    %v727 = vpop.f32.mrb[0].mxu0
    %v728 = vpop.f32.mrb[0].mxu0
    %v729 = vadd.f32 %v584, %v728
    %v730 = vpop.f32.mrb[0].mxu0
    %731 = vmatprep.mubr.bf16.mxu0 0
    %732 = vmatmul.mubr.bf16.gmra.mrb[0].mxu0 %v222
    %v733 = vpop.f32.mrb[0].mxu0
    %v734 = vadd.f32 %v589, %v733
    %v735 = vpop.f32.mrb[0].mxu0
    %v736 = vpop.f32.mrb[0].mxu0
    %v737 = vadd.f32 %v592, %v736
    %v738 = vpop.f32.mrb[0].mxu0
    %739 = vmatprep.mubr.bf16.mxu0 0
    %740 = vmatmul.mubr.bf16.gmra.mrb[0].mxu0 %v223
    %v741 = vpop.f32.mrb[0].mxu0
    %v742 = vadd.f32 %v597, %v741
    %v743 = vpop.f32.mrb[0].mxu0
    %v744 = vpop.f32.mrb[0].mxu0
    %v745 = vadd.f32 %v600, %v744
    %v746 = vpop.f32.mrb[0].mxu0
    %747 = vmatprep.mubr.bf16.mxu0 0
    %748 = vmatmul.mubr.bf16.gmra.mrb[0].mxu0 %v224
    %v749 = vpop.f32.mrb[0].mxu0
    %v750 = vadd.f32 %v605, %v749
    %v751 = vpop.f32.mrb[0].mxu0
    %v752 = vpop.f32.mrb[0].mxu0
    %v753 = vadd.f32 %v608, %v752
    %v754 = vpop.f32.mrb[0].mxu0
    %755 = vdwg.mxu0
    %v756 = vld [vmem:[%s5] sm:$0x1]
    %v758 = vlaneseq
    %v759 = vshrl.u32 %v758, 7
    %v760 = vsub.s32 0, %v759
    %v761 = vrot.slane %v756, %v760
    %v763 = vadd.f32 %v694, %v761
    %v764 = vadd.f32 %v697, %v761
    %v765 = vadd.f32 %v702, %v761
    %v766 = vadd.f32 %v705, %v761
    %v767 = vadd.f32 %v710, %v761
    %v768 = vadd.f32 %v713, %v761
    %v769 = vadd.f32 %v718, %v761
    %v770 = vadd.f32 %v721, %v761
    %v771 = vadd.f32 %v726, %v761
    %v772 = vadd.f32 %v729, %v761
    %v773 = vadd.f32 %v734, %v761
    %v774 = vadd.f32 %v737, %v761
    %v775 = vadd.f32 %v742, %v761
    %v776 = vadd.f32 %v745, %v761
    %v777 = vadd.f32 %v750, %v761
    %v778 = vadd.f32 %v753, %v761
    %v779 = vmax.f32 %v763, 0.0
    %v780 = vmax.f32 %v764, 0.0
    %v781 = vmax.f32 %v765, 0.0
    %v782 = vmax.f32 %v766, 0.0
    %v783 = vmax.f32 %v767, 0.0
    %v784 = vmax.f32 %v768, 0.0
    %v785 = vmax.f32 %v769, 0.0
    %v786 = vmax.f32 %v770, 0.0
    %v787 = vmax.f32 %v771, 0.0
    %v788 = vmax.f32 %v772, 0.0
    %v789 = vmax.f32 %v773, 0.0
    %v790 = vmax.f32 %v774, 0.0
    %v791 = vmax.f32 %v775, 0.0
    %v792 = vmax.f32 %v776, 0.0
    %v793 = vmax.f32 %v777, 0.0
    %v794 = vmax.f32 %v778, 0.0
    %v795 = vpack.c.bf16 %v780, %v779
    %v796 = vpack.c.bf16 %v782, %v781
    %v797 = vpack.c.bf16 %v784, %v783
    %v798 = vpack.c.bf16 %v786, %v785
    %v799 = vpack.c.bf16 %v788, %v787
    %v800 = vpack.c.bf16 %v790, %v789
    %v801 = vpack.c.bf16 %v792, %v791
    %v802 = vpack.c.bf16 %v794, %v793
    %803 = vmatprep.subr.bf16.mxu0 0
    %804 = vmatpush1.bf16.msra.mxu0 %v795
    %805 = vmatprep.subr.bf16.mxu0 0
    %806 = vmatpush1.bf16.msra.mxu0 %v796
    %807 = vmatprep.subr.bf16.mxu0 0
    %808 = vmatpush1.bf16.msra.mxu0 %v797
    %809 = vmatprep.subr.bf16.mxu0 0
    %810 = vmatpush1.bf16.msra.mxu0 %v798
    %811 = vmatprep.subr.bf16.mxu0 0
    %812 = vmatpush1.bf16.msra.mxu0 %v799
    %813 = vmatprep.subr.bf16.mxu0 0
    %814 = vmatpush1.bf16.msra.mxu0 %v800
    %815 = vmatprep.subr.bf16.mxu0 0
    %816 = vmatpush1.bf16.msra.mxu0 %v801
    %817 = vmatprep.subr.bf16.mxu0 0
    %818 = vmatpush1.bf16.msra.mxu0 %v802
    %819 = vmatprep.subr.bf16.mxu0 0
    %820 = vmatpush1.bf16.msra.mxu0 0
    %821 = vmatprep.subr.bf16.mxu0 0
    %822 = vmatpush1.bf16.msra.mxu0 0
    %823 = vmatprep.subr.bf16.mxu0 0
    %824 = vmatpush1.bf16.msra.mxu0 0
    %825 = vmatprep.subr.bf16.mxu0 0
    %826 = vmatpush1.bf16.msra.mxu0 0
    %827 = vmatprep.subr.bf16.mxu0 0
    %828 = vmatpush1.bf16.msra.mxu0 0
    %829 = vmatprep.subr.bf16.mxu0 0
    %830 = vmatpush1.bf16.msra.mxu0 0
    %831 = vmatprep.subr.bf16.mxu0 0
    %832 = vmatpush1.bf16.msra.mxu0 0
    %833 = vmatprep.subr.bf16.mxu0 0
    %834 = vmatpush1.bf16.msra.mxu0 0
    %835 = vmatprep.mubr.bf16.mxu0 0
    %836 = vmatmul.mubr.bf16.gmra.mrb[0].mxu0 %v169
    %v837 = vpop.f32.mrb[0].mxu0
    %v838 = vadd.f32 0.0, %v837
    %v839 = vpop.f32.mrb[0].mxu0
    %v840 = vpop.f32.mrb[0].mxu0
    %v841 = vadd.f32 0.0, %v840
    %v842 = vpop.f32.mrb[0].mxu0
    %843 = vmatprep.mubr.bf16.mxu0 0
    %844 = vmatmul.mubr.bf16.gmra.mrb[0].mxu0 %v170
    %v845 = vpop.f32.mrb[0].mxu0
    %v846 = vadd.f32 0.0, %v845
    %v847 = vpop.f32.mrb[0].mxu0
    %v848 = vpop.f32.mrb[0].mxu0
    %v849 = vadd.f32 0.0, %v848
    %v850 = vpop.f32.mrb[0].mxu0
    %851 = vmatprep.mubr.bf16.mxu0 0
    %852 = vmatmul.mubr.bf16.gmra.mrb[0].mxu0 %v171
    %v853 = vpop.f32.mrb[0].mxu0
    %v854 = vadd.f32 0.0, %v853
    %v855 = vpop.f32.mrb[0].mxu0
    %v856 = vpop.f32.mrb[0].mxu0
    %v857 = vadd.f32 0.0, %v856
    %v858 = vpop.f32.mrb[0].mxu0
    %859 = vmatprep.mubr.bf16.mxu0 0
    %860 = vmatmul.mubr.bf16.gmra.mrb[0].mxu0 %v172
    %v861 = vpop.f32.mrb[0].mxu0
    %v862 = vadd.f32 0.0, %v861
    %v863 = vpop.f32.mrb[0].mxu0
    %v864 = vpop.f32.mrb[0].mxu0
    %v865 = vadd.f32 0.0, %v864
    %v866 = vpop.f32.mrb[0].mxu0
    %867 = vmatprep.mubr.bf16.mxu0 0
    %868 = vmatmul.mubr.bf16.gmra.mrb[0].mxu0 %v173
    %v869 = vpop.f32.mrb[0].mxu0
    %v870 = vadd.f32 0.0, %v869
    %v871 = vpop.f32.mrb[0].mxu0
    %v872 = vpop.f32.mrb[0].mxu0
    %v873 = vadd.f32 0.0, %v872
    %v874 = vpop.f32.mrb[0].mxu0
    %875 = vmatprep.mubr.bf16.mxu0 0
    %876 = vmatmul.mubr.bf16.gmra.mrb[0].mxu0 %v174
    %v877 = vpop.f32.mrb[0].mxu0
    %v878 = vadd.f32 0.0, %v877
    %v879 = vpop.f32.mrb[0].mxu0
    %v880 = vpop.f32.mrb[0].mxu0
    %v881 = vadd.f32 0.0, %v880
    %v882 = vpop.f32.mrb[0].mxu0
    %883 = vmatprep.mubr.bf16.mxu0 0
    %884 = vmatmul.mubr.bf16.gmra.mrb[0].mxu0 %v175
    %v885 = vpop.f32.mrb[0].mxu0
    %v886 = vadd.f32 0.0, %v885
    %v887 = vpop.f32.mrb[0].mxu0
    %v888 = vpop.f32.mrb[0].mxu0
    %v889 = vadd.f32 0.0, %v888
    %v890 = vpop.f32.mrb[0].mxu0
    %891 = vmatprep.mubr.bf16.mxu0 0
    %892 = vmatmul.mubr.bf16.gmra.mrb[0].mxu0 %v176
    %v893 = vpop.f32.mrb[0].mxu0
    %v894 = vadd.f32 0.0, %v893
    %v895 = vpop.f32.mrb[0].mxu0
    %v896 = vpop.f32.mrb[0].mxu0
    %v897 = vadd.f32 0.0, %v896
    %v898 = vpop.f32.mrb[0].mxu0
    %899 = vdwg.mxu0
    %v900 = vmul.f32 %v838, %v333
    %v901 = vmul.f32 %v841, %v338
    %v902 = vmul.f32 %v846, %v343
    %v903 = vmul.f32 %v849, %v348
    %v904 = vmul.f32 %v854, %v353
    %v905 = vmul.f32 %v857, %v358
    %v906 = vmul.f32 %v862, %v363
    %v907 = vmul.f32 %v865, %v368
    %v908 = vmul.f32 %v870, %v373
    %v909 = vmul.f32 %v873, %v378
    %v910 = vmul.f32 %v878, %v383
    %v911 = vmul.f32 %v881, %v388
    %v912 = vmul.f32 %v886, %v393
    %v913 = vmul.f32 %v889, %v398
    %v914 = vmul.f32 %v894, %v403
    %v915 = vmul.f32 %v897, %v408
    %v916 = vld [vmem:[#allocation7] sm:$0xf]
    %v917 = vld [vmem:[#allocation7 + $0x4] sm:$0xf]
    %v918 = vld [vmem:[#allocation7 + $0x8] sm:$0xf]
    %v919 = vld [vmem:[#allocation7 + $0xc] sm:$0xf]
    %v920 = vld [vmem:[#allocation7 + $0x10] sm:$0xf]
    %v921 = vld [vmem:[#allocation7 + $0x14] sm:$0xf]
    %v922 = vld [vmem:[#allocation7 + $0x18] sm:$0xf]
    %v923 = vld [vmem:[#allocation7 + $0x1c] sm:$0xf]
    %v924 = vld [vmem:[#allocation7 + $0x20] sm:$0xf]
    %v925 = vld [vmem:[#allocation7 + $0x24] sm:$0xf]
    %v926 = vld [vmem:[#allocation7 + $0x28] sm:$0xf]
    %v927 = vld [vmem:[#allocation7 + $0x2c] sm:$0xf]
    %v928 = vld [vmem:[#allocation7 + $0x30] sm:$0xf]
    %v929 = vld [vmem:[#allocation7 + $0x34] sm:$0xf]
    %v930 = vld [vmem:[#allocation7 + $0x38] sm:$0xf]
    %v931 = vld [vmem:[#allocation7 + $0x3c] sm:$0xf]
    %v932 = vpack.c.bf16 %v901, %v900
    %v933 = vpack.c.bf16 %v903, %v902
    %v934 = vpack.c.bf16 %v905, %v904
    %v935 = vpack.c.bf16 %v907, %v906
    %v936 = vpack.c.bf16 %v909, %v908
    %v937 = vpack.c.bf16 %v911, %v910
    %v938 = vpack.c.bf16 %v913, %v912
    %v939 = vpack.c.bf16 %v915, %v914
    %v940 = vld [vmem:[#allocation8] sm:$0xf]
    %v941 = vld [vmem:[#allocation8 + $0x4] sm:$0xf]
    %v942 = vld [vmem:[#allocation8 + $0x8] sm:$0xf]
    %v943 = vld [vmem:[#allocation8 + $0xc] sm:$0xf]
    %v944 = vld [vmem:[#allocation8 + $0x10] sm:$0xf]
    %v945 = vld [vmem:[#allocation8 + $0x14] sm:$0xf]
    %v946 = vld [vmem:[#allocation8 + $0x18] sm:$0xf]
    %v947 = vld [vmem:[#allocation8 + $0x1c] sm:$0xf]
    %v948 = vld [vmem:[#allocation8 + $0x20] sm:$0xf]
    %v949 = vld [vmem:[#allocation8 + $0x24] sm:$0xf]
    %v950 = vld [vmem:[#allocation8 + $0x28] sm:$0xf]
    %v951 = vld [vmem:[#allocation8 + $0x2c] sm:$0xf]
    %v952 = vld [vmem:[#allocation8 + $0x30] sm:$0xf]
    %v953 = vld [vmem:[#allocation8 + $0x34] sm:$0xf]
    %v954 = vld [vmem:[#allocation8 + $0x38] sm:$0xf]
    %v955 = vld [vmem:[#allocation8 + $0x3c] sm:$0xf]
    %v972 = vunpack.c.l.b16 %v940
    %v973 = vunpack.c.l.b16 %v941
    %v974 = vunpack.c.l.b16 %v942
    %v975 = vunpack.c.l.b16 %v943
    %v976 = vunpack.c.l.b16 %v944
    %v977 = vunpack.c.l.b16 %v945
    %v978 = vunpack.c.l.b16 %v946
    %v979 = vunpack.c.l.b16 %v947
    %v980 = vunpack.c.l.b16 %v948
    %v981 = vunpack.c.l.b16 %v949
    %v982 = vunpack.c.l.b16 %v950
    %v983 = vunpack.c.l.b16 %v951
    %v984 = vunpack.c.l.b16 %v952
    %v985 = vunpack.c.l.b16 %v953
    %v986 = vunpack.c.l.b16 %v954
    %v987 = vunpack.c.l.b16 %v955
    %v988 = vpack.c.b16 %v973, %v972
    %v989 = vpack.c.b16 %v975, %v974
    %v990 = vpack.c.b16 %v977, %v976
    %v991 = vpack.c.b16 %v979, %v978
    %v992 = vpack.c.b16 %v981, %v980
    %v993 = vpack.c.b16 %v983, %v982
    %v994 = vpack.c.b16 %v985, %v984
    %v995 = vpack.c.b16 %v987, %v986
    %1004 = vmatprep.subr.bf16.mxu0 0
    %1005 = vmatpush1.bf16.msra.mxu0 %v988
    %1006 = vmatprep.subr.bf16.mxu0 0
    %1007 = vmatpush1.bf16.msra.mxu0 %v989
    %1008 = vmatprep.subr.bf16.mxu0 0
    %1009 = vmatpush1.bf16.msra.mxu0 %v990
    %1010 = vmatprep.subr.bf16.mxu0 0
    %1011 = vmatpush1.bf16.msra.mxu0 %v991
    %1012 = vmatprep.subr.bf16.mxu0 0
    %1013 = vmatpush1.bf16.msra.mxu0 %v992
    %1014 = vmatprep.subr.bf16.mxu0 0
    %1015 = vmatpush1.bf16.msra.mxu0 %v993
    %1016 = vmatprep.subr.bf16.mxu0 0
    %1017 = vmatpush1.bf16.msra.mxu0 %v994
    %1018 = vmatprep.subr.bf16.mxu0 0
    %1019 = vmatpush1.bf16.msra.mxu0 %v995
    %1020 = vmatprep.subr.bf16.mxu0 0
    %1021 = vmatpush1.bf16.msra.mxu0 0
    %1022 = vmatprep.subr.bf16.mxu0 0
    %1023 = vmatpush1.bf16.msra.mxu0 0
    %1024 = vmatprep.subr.bf16.mxu0 0
    %1025 = vmatpush1.bf16.msra.mxu0 0
    %1026 = vmatprep.subr.bf16.mxu0 0
    %1027 = vmatpush1.bf16.msra.mxu0 0
    %1028 = vmatprep.subr.bf16.mxu0 0
    %1029 = vmatpush1.bf16.msra.mxu0 0
    %1030 = vmatprep.subr.bf16.mxu0 0
    %1031 = vmatpush1.bf16.msra.mxu0 0
    %1032 = vmatprep.subr.bf16.mxu0 0
    %1033 = vmatpush1.bf16.msra.mxu0 0
    %1034 = vmatprep.subr.bf16.mxu0 0
    %1035 = vmatpush1.bf16.msra.mxu0 0
    %1036 = vmatprep.mubr.bf16.mxu0 0
    %1037 = vmatmul.mubr.bf16.gmra.mrb[0].mxu0 %v932
    %v1038 = vpop.f32.mrb[0].mxu0
    %v1039 = vadd.f32 0.0, %v1038
    %v1040 = vpop.f32.mrb[0].mxu0
    %v1041 = vpop.f32.mrb[0].mxu0
    %v1042 = vadd.f32 0.0, %v1041
    %v1043 = vpop.f32.mrb[0].mxu0
    %1044 = vmatprep.mubr.bf16.mxu0 0
    %1045 = vmatmul.mubr.bf16.gmra.mrb[0].mxu0 %v933
    %v1046 = vpop.f32.mrb[0].mxu0
    %v1047 = vadd.f32 0.0, %v1046
    %v1048 = vpop.f32.mrb[0].mxu0
    %v1049 = vpop.f32.mrb[0].mxu0
    %v1050 = vadd.f32 0.0, %v1049
    %v1051 = vpop.f32.mrb[0].mxu0
    %1052 = vmatprep.mubr.bf16.mxu0 0
    %1053 = vmatmul.mubr.bf16.gmra.mrb[0].mxu0 %v934
    %v1054 = vpop.f32.mrb[0].mxu0
    %v1055 = vadd.f32 0.0, %v1054
    %v1056 = vpop.f32.mrb[0].mxu0
    %v1057 = vpop.f32.mrb[0].mxu0
    %v1058 = vadd.f32 0.0, %v1057
    %v1059 = vpop.f32.mrb[0].mxu0
    %1060 = vmatprep.mubr.bf16.mxu0 0
    %1061 = vmatmul.mubr.bf16.gmra.mrb[0].mxu0 %v935
    %v1062 = vpop.f32.mrb[0].mxu0
    %v1063 = vadd.f32 0.0, %v1062
    %v1064 = vpop.f32.mrb[0].mxu0
    %v1065 = vpop.f32.mrb[0].mxu0
    %v1066 = vadd.f32 0.0, %v1065
    %v1067 = vpop.f32.mrb[0].mxu0
    %1068 = vmatprep.mubr.bf16.mxu0 0
    %1069 = vmatmul.mubr.bf16.gmra.mrb[0].mxu0 %v936
    %v1070 = vpop.f32.mrb[0].mxu0
    %v1071 = vadd.f32 0.0, %v1070
    %v1072 = vpop.f32.mrb[0].mxu0
    %v1073 = vpop.f32.mrb[0].mxu0
    %v1074 = vadd.f32 0.0, %v1073
    %v1075 = vpop.f32.mrb[0].mxu0
    %1076 = vmatprep.mubr.bf16.mxu0 0
    %1077 = vmatmul.mubr.bf16.gmra.mrb[0].mxu0 %v937
    %v1078 = vpop.f32.mrb[0].mxu0
    %v1079 = vadd.f32 0.0, %v1078
    %v1080 = vpop.f32.mrb[0].mxu0
    %v1081 = vpop.f32.mrb[0].mxu0
    %v1082 = vadd.f32 0.0, %v1081
    %v1083 = vpop.f32.mrb[0].mxu0
    %1084 = vmatprep.mubr.bf16.mxu0 0
    %1085 = vmatmul.mubr.bf16.gmra.mrb[0].mxu0 %v938
    %v1086 = vpop.f32.mrb[0].mxu0
    %v1087 = vadd.f32 0.0, %v1086
    %v1088 = vpop.f32.mrb[0].mxu0
    %v1089 = vpop.f32.mrb[0].mxu0
    %v1090 = vadd.f32 0.0, %v1089
    %v1091 = vpop.f32.mrb[0].mxu0
    %1092 = vmatprep.mubr.bf16.mxu0 0
    %1093 = vmatmul.mubr.bf16.gmra.mrb[0].mxu0 %v939
    %v1094 = vpop.f32.mrb[0].mxu0
    %v1095 = vadd.f32 0.0, %v1094
    %v1096 = vpop.f32.mrb[0].mxu0
    %v1097 = vpop.f32.mrb[0].mxu0
    %v1098 = vadd.f32 0.0, %v1097
    %v1099 = vpop.f32.mrb[0].mxu0
    %1100 = vdwg.mxu0
    %v1117 = vunpack.c.l.b16 %v916
    %v1118 = vunpack.c.l.b16 %v917
    %v1119 = vunpack.c.l.b16 %v918
    %v1120 = vunpack.c.l.b16 %v919
    %v1121 = vunpack.c.l.b16 %v920
    %v1122 = vunpack.c.l.b16 %v921
    %v1123 = vunpack.c.l.b16 %v922
    %v1124 = vunpack.c.l.b16 %v923
    %v1125 = vunpack.c.l.b16 %v924
    %v1126 = vunpack.c.l.b16 %v925
    %v1127 = vunpack.c.l.b16 %v926
    %v1128 = vunpack.c.l.b16 %v927
    %v1129 = vunpack.c.l.b16 %v928
    %v1130 = vunpack.c.l.b16 %v929
    %v1131 = vunpack.c.l.b16 %v930
    %v1132 = vunpack.c.l.b16 %v931
    %v1133 = vpack.c.b16 %v1118, %v1117
    %v1134 = vpack.c.b16 %v1120, %v1119
    %v1135 = vpack.c.b16 %v1122, %v1121
    %v1136 = vpack.c.b16 %v1124, %v1123
    %v1137 = vpack.c.b16 %v1126, %v1125
    %v1138 = vpack.c.b16 %v1128, %v1127
    %v1139 = vpack.c.b16 %v1130, %v1129
    %v1140 = vpack.c.b16 %v1132, %v1131
    %1149 = vmatprep.subr.bf16.mxu0 0
    %1150 = vmatpush1.bf16.msra.mxu0 %v1133
    %1151 = vmatprep.subr.bf16.mxu0 0
    %1152 = vmatpush1.bf16.msra.mxu0 %v1134
    %1153 = vmatprep.subr.bf16.mxu0 0
    %1154 = vmatpush1.bf16.msra.mxu0 %v1135
    %1155 = vmatprep.subr.bf16.mxu0 0
    %1156 = vmatpush1.bf16.msra.mxu0 %v1136
    %1157 = vmatprep.subr.bf16.mxu0 0
    %1158 = vmatpush1.bf16.msra.mxu0 %v1137
    %1159 = vmatprep.subr.bf16.mxu0 0
    %1160 = vmatpush1.bf16.msra.mxu0 %v1138
    %1161 = vmatprep.subr.bf16.mxu0 0
    %1162 = vmatpush1.bf16.msra.mxu0 %v1139
    %1163 = vmatprep.subr.bf16.mxu0 0
    %1164 = vmatpush1.bf16.msra.mxu0 %v1140
    %1165 = vmatprep.subr.bf16.mxu0 0
    %1166 = vmatpush1.bf16.msra.mxu0 0
    %1167 = vmatprep.subr.bf16.mxu0 0
    %1168 = vmatpush1.bf16.msra.mxu0 0
    %1169 = vmatprep.subr.bf16.mxu0 0
    %1170 = vmatpush1.bf16.msra.mxu0 0
    %1171 = vmatprep.subr.bf16.mxu0 0
    %1172 = vmatpush1.bf16.msra.mxu0 0
    %1173 = vmatprep.subr.bf16.mxu0 0
    %1174 = vmatpush1.bf16.msra.mxu0 0
    %1175 = vmatprep.subr.bf16.mxu0 0
    %1176 = vmatpush1.bf16.msra.mxu0 0
    %1177 = vmatprep.subr.bf16.mxu0 0
    %1178 = vmatpush1.bf16.msra.mxu0 0
    %1179 = vmatprep.subr.bf16.mxu0 0
    %1180 = vmatpush1.bf16.msra.mxu0 0
    %1181 = vmatprep.mubr.bf16.mxu0 0
    %1182 = vmatmul.mubr.bf16.gmra.mrb[0].mxu0 %v795
    %v1183 = vpop.f32.mrb[0].mxu0
    %v1184 = vadd.f32 %v1039, %v1183
    %v1185 = vpop.f32.mrb[0].mxu0
    %v1186 = vpop.f32.mrb[0].mxu0
    %v1187 = vadd.f32 %v1042, %v1186
    %v1188 = vpop.f32.mrb[0].mxu0
    %1189 = vmatprep.mubr.bf16.mxu0 0
    %1190 = vmatmul.mubr.bf16.gmra.mrb[0].mxu0 %v796
    %v1191 = vpop.f32.mrb[0].mxu0
    %v1192 = vadd.f32 %v1047, %v1191
    %v1193 = vpop.f32.mrb[0].mxu0
    %v1194 = vpop.f32.mrb[0].mxu0
    %v1195 = vadd.f32 %v1050, %v1194
    %v1196 = vpop.f32.mrb[0].mxu0
    %1197 = vmatprep.mubr.bf16.mxu0 0
    %1198 = vmatmul.mubr.bf16.gmra.mrb[0].mxu0 %v797
    %v1199 = vpop.f32.mrb[0].mxu0
    %v1200 = vadd.f32 %v1055, %v1199
    %v1201 = vpop.f32.mrb[0].mxu0
    %v1202 = vpop.f32.mrb[0].mxu0
    %v1203 = vadd.f32 %v1058, %v1202
    %v1204 = vpop.f32.mrb[0].mxu0
    %1205 = vmatprep.mubr.bf16.mxu0 0
    %1206 = vmatmul.mubr.bf16.gmra.mrb[0].mxu0 %v798
    %v1207 = vpop.f32.mrb[0].mxu0
    %v1208 = vadd.f32 %v1063, %v1207
    %v1209 = vpop.f32.mrb[0].mxu0
    %v1210 = vpop.f32.mrb[0].mxu0
    %v1211 = vadd.f32 %v1066, %v1210
    %v1212 = vpop.f32.mrb[0].mxu0
    %1213 = vmatprep.mubr.bf16.mxu0 0
    %1214 = vmatmul.mubr.bf16.gmra.mrb[0].mxu0 %v799
    %v1215 = vpop.f32.mrb[0].mxu0
    %v1216 = vadd.f32 %v1071, %v1215
    %v1217 = vpop.f32.mrb[0].mxu0
    %v1218 = vpop.f32.mrb[0].mxu0
    %v1219 = vadd.f32 %v1074, %v1218
    %v1220 = vpop.f32.mrb[0].mxu0
    %1221 = vmatprep.mubr.bf16.mxu0 0
    %1222 = vmatmul.mubr.bf16.gmra.mrb[0].mxu0 %v800
    %v1223 = vpop.f32.mrb[0].mxu0
    %v1224 = vadd.f32 %v1079, %v1223
    %v1225 = vpop.f32.mrb[0].mxu0
    %v1226 = vpop.f32.mrb[0].mxu0
    %v1227 = vadd.f32 %v1082, %v1226
    %v1228 = vpop.f32.mrb[0].mxu0
    %1229 = vmatprep.mubr.bf16.mxu0 0
    %1230 = vmatmul.mubr.bf16.gmra.mrb[0].mxu0 %v801
    %v1231 = vpop.f32.mrb[0].mxu0
    %v1232 = vadd.f32 %v1087, %v1231
    %v1233 = vpop.f32.mrb[0].mxu0
    %v1234 = vpop.f32.mrb[0].mxu0
    %v1235 = vadd.f32 %v1090, %v1234
    %v1236 = vpop.f32.mrb[0].mxu0
    %1237 = vmatprep.mubr.bf16.mxu0 0
    %1238 = vmatmul.mubr.bf16.gmra.mrb[0].mxu0 %v802
    %v1239 = vpop.f32.mrb[0].mxu0
    %v1240 = vadd.f32 %v1095, %v1239
    %v1241 = vpop.f32.mrb[0].mxu0
    %v1242 = vpop.f32.mrb[0].mxu0
    %v1243 = vadd.f32 %v1098, %v1242
    %v1244 = vpop.f32.mrb[0].mxu0
    %1245 = vdwg.mxu0
    %v1246 = vld [vmem:[%s8] sm:$0x1]
    %v1248 = vlaneseq
    %v1249 = vshrl.u32 %v1248, 7
    %v1250 = vsub.s32 0, %v1249
    %v1251 = vrot.slane %v1246, %v1250
    %v1253 = vadd.f32 %v1184, %v1251
    %v1254 = vadd.f32 %v1187, %v1251
    %v1255 = vadd.f32 %v1192, %v1251
    %v1256 = vadd.f32 %v1195, %v1251
    %v1257 = vadd.f32 %v1200, %v1251
    %v1258 = vadd.f32 %v1203, %v1251
    %v1259 = vadd.f32 %v1208, %v1251
    %v1260 = vadd.f32 %v1211, %v1251
    %v1261 = vadd.f32 %v1216, %v1251
    %v1262 = vadd.f32 %v1219, %v1251
    %v1263 = vadd.f32 %v1224, %v1251
    %v1264 = vadd.f32 %v1227, %v1251
    %v1265 = vadd.f32 %v1232, %v1251
    %v1266 = vadd.f32 %v1235, %v1251
    %v1267 = vadd.f32 %v1240, %v1251
    %v1268 = vadd.f32 %v1243, %v1251
    %1269 = vst [vmem:[#allocation10] sm:$0xff] %v1253
    %1270 = vst [vmem:[#allocation10 + $0x8] sm:$0xff] %v1254
    %1271 = vst [vmem:[#allocation10 + $0x10] sm:$0xff] %v1255
    %1272 = vst [vmem:[#allocation10 + $0x18] sm:$0xff] %v1256
    %1273 = vst [vmem:[#allocation10 + $0x20] sm:$0xff] %v1257
    %1274 = vst [vmem:[#allocation10 + $0x28] sm:$0xff] %v1258
    %1275 = vst [vmem:[#allocation10 + $0x30] sm:$0xff] %v1259
    %1276 = vst [vmem:[#allocation10 + $0x38] sm:$0xff] %v1260
    %1277 = vst [vmem:[#allocation10 + $0x40] sm:$0xff] %v1261
    %1278 = vst [vmem:[#allocation10 + $0x48] sm:$0xff] %v1262
    %1279 = vst [vmem:[#allocation10 + $0x50] sm:$0xff] %v1263
    %1280 = vst [vmem:[#allocation10 + $0x58] sm:$0xff] %v1264
    %1281 = vst [vmem:[#allocation10 + $0x60] sm:$0xff] %v1265
    %1282 = vst [vmem:[#allocation10 + $0x68] sm:$0xff] %v1266
    %1283 = vst [vmem:[#allocation10 + $0x70] sm:$0xff] %v1267
    %1284 = vst [vmem:[#allocation10 + $0x78] sm:$0xff] %v1268
    // Predicated region
    $region54: #{tpu_custom_call.1} parent=1 // pred_check
      _
    $region55: #{tpu_custom_call.1} parent=1 // pred_check_branch
      %1286 = sbr.rel (0) target = $region57
    $region56: #{tpu_custom_call.1} parent=1 // pred_region
      %s1288 = ssub.s32 2048, 2048
      %1289 = vsyncadd [#allocation4], %s1288
      %s1290 = sshll.u32 [#allocation10], 4
      %s1291 = int_to_ptr.vmem [resolvable:$true] %s1290
      %1296 = dma.vmem_to_hbm [thread:$0]  %s1291, 2048, %s9, [#allocation4], 128, 128, 8
    $region57: #{tpu_custom_call.1} parent=1 // pred_fallthru
      _
    // Predicated region
    $region58: #{tpu_custom_call.1} parent=1 // pred_check
      _
    $region59: #{tpu_custom_call.1} parent=1 // pred_check_branch
      %1298 = sbr.rel (0) target = $region61
    $region60: #{tpu_custom_call.1} parent=1 // pred_region
      %1299 = dma.done [#allocation4], 2048
    $region61: #{tpu_custom_call.1} parent=1 // pred_fallthru
      _
    %1300 = vsyncpa [#allocation3], 1
    %1301 = vsyncpa [#allocation6], 1
    %1302 = vsyncpa [#allocation9], 1
    %1303 = vsyncpa [#allocation4], 1

</llo_original>
